<compile_context>
chip_gen: v7x
topology: tpu7x:2x2x1
jax: 0.10.0
libtpu: 0.0.40
codegen_flags: <defaults>
</compile_context>

<pallas_src>
import functools

import jax
import jax.numpy as jnp
from jax import lax
from jax.experimental import pallas as pl
from jax.experimental.pallas import tpu as pltpu


def _vmem_limit(need_bytes):
    # >= scoped default everywhere, <= v7x physical (64 MiB).
    return int(min(64 << 20, max(32 << 20, 2 * int(need_bytes))))


def _im2col(x, K):
    """(N, C, H, W) -> (N, C*K*K, H*W) patches, Kd ordered (c, ki, kj)."""
    N, C, H, W = x.shape
    pad = K // 2
    xp = jnp.pad(x, ((0, 0), (0, 0), (pad, pad), (pad, pad)))
    cols = [xp[:, :, ki:ki + H, kj:kj + W] for ki in range(K) for kj in range(K)]
    p = jnp.stack(cols, axis=2)                      # (N, C, K*K, H, W)
    return p.reshape(N, C * K * K, H * W)            # (N, Kd, S)


def _pick_spatial_tile(S, ts_max=2048):
    if S <= ts_max or S % 128 != 0:
        return S
    for cand in (2048, 1024, 512, 256, 128):
        if cand <= ts_max and S % cand == 0:
            return cand
    return S


# ---------------- fully-fused conv + BN (single grid step, small inputs) -----
def _conv_bn_fused_kernel(p_ref, w_ref, g_ref, b_ref, o_ref, *, inv_m, eps):
    # p_ref: (N, Kd, S) bf16, w_ref: (F1, Kd) bf16, g/b: (F1, 1) f32,
    # o_ref: (N, F1, S) f32.
    n_batch = p_ref.shape[0]
    w = w_ref[...]
    s_acc = None
    q_acc = None
    for n in range(n_batch):                              # static unroll, N small
        h = jnp.dot(w, p_ref[n], preferred_element_type=jnp.float32)   # (F1, S)
        o_ref[n] = h                                      # stash pre-BN activations
        bs = jnp.sum(h, axis=1, keepdims=True)            # (F1, 1)
        bq = jnp.sum(h * h, axis=1, keepdims=True)
        s_acc = bs if s_acc is None else s_acc + bs
        q_acc = bq if q_acc is None else q_acc + bq
    mean = s_acc * inv_m
    # E[x^2]-E[x]^2 in f32; clamped to >=0 (fine at these reduction sizes).
    var = jnp.maximum(q_acc * inv_m - mean * mean, 0.0)
    scale = g_ref[...] * lax.rsqrt(var + eps)
    shift = b_ref[...] - mean * scale
    for n in range(n_batch):
        o_ref[n] = o_ref[n] * scale + shift


# ---------------- two-pass conv + BN with VMEM h-cache (larger inputs) -------
def _conv_bn_grid_kernel(p_ref, w_ref, g_ref, b_ref, o_ref,
                         h_cache, sum_acc, sq_acc, scale_sc, shift_sc,
                         *, inv_m, eps, use_cache):
    p = pl.program_id(0)          # 0 = stats pass, 1 = normalize/write pass
    i = pl.program_id(1)          # (sample, spatial-block) flat index

    @pl.when(p == 0)
    def _():
        h = jnp.dot(w_ref[...], p_ref[0], preferred_element_type=jnp.float32)
        if use_cache:
            h_cache[i] = h
        bs = jnp.sum(h, axis=1, keepdims=True)
        bq = jnp.sum(h * h, axis=1, keepdims=True)

        @pl.when(i == 0)
        def _():
            sum_acc[...] = bs
            sq_acc[...] = bq

        @pl.when(i != 0)
        def _():
            sum_acc[...] = sum_acc[...] + bs
            sq_acc[...] = sq_acc[...] + bq

    @pl.when(p == 1)
    def _():
        @pl.when(i == 0)
        def _():
            mean = sum_acc[...] * inv_m
            var = jnp.maximum(sq_acc[...] * inv_m - mean * mean, 0.0)
            scale = g_ref[...] * lax.rsqrt(var + eps)
            scale_sc[...] = scale
            shift_sc[...] = b_ref[...] - mean * scale

        if use_cache:
            h = h_cache[i]
        else:
            h = jnp.dot(w_ref[...], p_ref[0], preferred_element_type=jnp.float32)
        o_ref[0] = h * scale_sc[...] + shift_sc[...]


# ---------------- plain conv (+ optional fused bias), no BN ------------------
def _conv_kernel(p_ref, w_ref, o_ref):
    o_ref[0] = jnp.dot(w_ref[...], p_ref[0], preferred_element_type=jnp.float32)


def _conv_bias_kernel(p_ref, w_ref, b_ref, o_ref):
    o_ref[0] = (jnp.dot(w_ref[...], p_ref[0], preferred_element_type=jnp.float32)
                + b_ref[...])


# ---------------- wrapper -----------------------------------------------------
def conv_forward(x, weight, *, bn_gamma=None, bn_beta=None, bias=None,
                 bn=True, eps=1e-5, compute_dtype=jnp.bfloat16,
                 fuse_vmem_bytes=8 << 20, cache_vmem_bytes=24 << 20):
    """x: (N, C_in, H, W) f32 NCHW.  weight: (C_out, C_in, K, K).  Returns f32 NCHW."""
    N, C, H, W = x.shape
    F1, _, K, _ = weight.shape
    S = H * W
    Kd = C * K * K

    if bn:
        assert bias is None, "bias must be None when bn=True (module sets bias=False)"
        assert bn_gamma is not None and bn_beta is not None

    # --- im2col (XLA glue) in (N, Kd, S) orientation; bf16 operands ----------
    # TODO(synk): build patches per-tile inside the kernel for non-toy inputs.
    patches = _im2col(x, K).astype(compute_dtype)              # (N, Kd, S)
    w2d = weight.reshape(F1, Kd).astype(compute_dtype)         # (F1, Kd)
    itm = jnp.dtype(compute_dtype).itemsize

    out_shape = jax.ShapeDtypeStruct((N, F1, S), jnp.float32)
    ts = _pick_spatial_tile(S)
    nsb = S // ts
    nb = N * nsb
    inv_m = 1.0 / float(N * S)

    flops = 2 * N * S * Kd * F1
    bytes_accessed = patches.size * itm + w2d.size * itm + N * F1 * S * 4

    if bn:
        gamma2 = bn_gamma.astype(jnp.float32).reshape(F1, 1)
        beta2 = bn_beta.astype(jnp.float32).reshape(F1, 1)

        fused_bytes = N * (Kd * S * itm + F1 * S * 4) + F1 * Kd * itm
        if fused_bytes <= fuse_vmem_bytes and N <= 16:
            # ---- single-step fully fused path (the demo takes this) ----
            kernel = functools.partial(_conv_bn_fused_kernel, inv_m=inv_m, eps=eps)
            out = pl.pallas_call(
                kernel,
                out_shape=out_shape,
                grid=(1,),
                in_specs=[
                    pl.BlockSpec((N, Kd, S), lambda i: (0, 0, 0)),
                    pl.BlockSpec((F1, Kd), lambda i: (0, 0)),
                    pl.BlockSpec((F1, 1), lambda i: (0, 0)),
                    pl.BlockSpec((F1, 1), lambda i: (0, 0)),
                ],
                out_specs=pl.BlockSpec((N, F1, S), lambda i: (0, 0, 0)),
                compiler_params=pltpu.CompilerParams(
                    dimension_semantics=("arbitrary",),
                    vmem_limit_bytes=_vmem_limit(2 * fused_bytes)),
                cost_estimate=pl.CostEstimate(flops=flops, transcendentals=F1,
                                              bytes_accessed=bytes_accessed),
            )(patches, w2d, gamma2, beta2)
        else:
            # ---- two-pass grid path: pass 0 stats (+ cache h), pass 1 affine ----
            cache_bytes = nb * F1 * ts * 4
            use_cache = cache_bytes <= cache_vmem_bytes
            kernel = functools.partial(_conv_bn_grid_kernel, inv_m=inv_m,
                                       eps=eps, use_cache=use_cache)
            if use_cache:
                # pin patches to block 0 during pass 1 -> no re-DMA, no re-matmul
                p_idx = lambda p, i: (((1 - p) * i) // nsb, 0, ((1 - p) * i) % nsb)
                h_cache_shape = (nb, F1, ts)
            else:
                p_idx = lambda p, i: (i // nsb, 0, i % nsb)
                h_cache_shape = (1, 8, 128)              # unused dummy
            need = (cache_bytes if use_cache else 0) + \
                   2 * (Kd * ts * itm + F1 * ts * 4) + F1 * Kd * itm
            out = pl.pallas_call(
                kernel,
                out_shape=out_shape,
                grid=(2, nb),
                in_specs=[
                    pl.BlockSpec((1, Kd, ts), p_idx),
                    pl.BlockSpec((F1, Kd), lambda p, i: (0, 0)),
                    pl.BlockSpec((F1, 1), lambda p, i: (0, 0)),
                    pl.BlockSpec((F1, 1), lambda p, i: (0, 0)),
                ],
                # pass 0 pins output block 0 (no writebacks); pass 1 writes each once
                out_specs=pl.BlockSpec(
                    (1, F1, ts), lambda p, i: ((p * i) // nsb, 0, (p * i) % nsb)),
                scratch_shapes=[
                    pltpu.VMEM(h_cache_shape, jnp.float32),   # h cache
                    pltpu.VMEM((F1, 1), jnp.float32),          # sum
                    pltpu.VMEM((F1, 1), jnp.float32),          # sum of squares
                    pltpu.VMEM((F1, 1), jnp.float32),          # scale
                    pltpu.VMEM((F1, 1), jnp.float32),          # shift
                ],
                compiler_params=pltpu.CompilerParams(
                    dimension_semantics=("arbitrary", "arbitrary"),
                    vmem_limit_bytes=_vmem_limit(need)),
                cost_estimate=pl.CostEstimate(
                    flops=flops * (1 if use_cache else 2),
                    transcendentals=F1, bytes_accessed=bytes_accessed),
            )(patches, w2d, gamma2, beta2)
    else:
        in_specs = [
            pl.BlockSpec((1, Kd, ts), lambda i: (i // nsb, 0, i % nsb)),
            pl.BlockSpec((F1, Kd), lambda i: (0, 0)),
        ]
        operands = [patches, w2d]
        if bias is not None:
            kernel = _conv_bias_kernel
            in_specs.append(pl.BlockSpec((F1, 1), lambda i: (0, 0)))
            operands.append(bias.astype(jnp.float32).reshape(F1, 1))
        else:
            kernel = _conv_kernel
        need = 2 * (Kd * ts * itm + F1 * ts * 4) + F1 * Kd * itm
        out = pl.pallas_call(
            kernel,
            out_shape=out_shape,
            grid=(nb,),
            in_specs=in_specs,
            out_specs=pl.BlockSpec((1, F1, ts), lambda i: (i // nsb, 0, i % nsb)),
            compiler_params=pltpu.CompilerParams(
                dimension_semantics=("parallel",),
                vmem_limit_bytes=_vmem_limit(need)),
            cost_estimate=pl.CostEstimate(flops=flops, transcendentals=0,
                                          bytes_accessed=bytes_accessed),
        )(*operands)

    return out.reshape(N, F1, H, W)          # (N, C_out, H*W) -> NCHW, free reshape


# ---------------- reference (matching operand precision) ----------------------
def conv_forward_ref(x, weight, bn_gamma=None, bn_beta=None, bias=None,
                     bn=True, eps=1e-5, compute_dtype=jnp.bfloat16):
    pad = weight.shape[2] // 2
    h = lax.conv_general_dilated(
        x.astype(compute_dtype), weight.astype(compute_dtype),
        window_strides=(1, 1), padding=[(pad, pad), (pad, pad)],
        dimension_numbers=("NCHW", "OIHW", "NCHW"),
        preferred_element_type=jnp.float32)
    if not bn:
        if bias is not None:
            h = h + bias.astype(jnp.float32).reshape(1, -1, 1, 1)
        return h
    mean = jnp.mean(h, axis=(0, 2, 3), keepdims=True)
    var = jnp.mean((h - mean) ** 2, axis=(0, 2, 3), keepdims=True)
    hn = (h - mean) * lax.rsqrt(var + eps)
    return hn * bn_gamma.reshape(1, -1, 1, 1) + bn_beta.reshape(1, -1, 1, 1)


if __name__ == "__main__":
    # Conv(filters0=4, filters1=32, kernel_size=3, bn=True) -> bias disabled
    N, C_IN, H, W = 2, 4, 16, 16
    C_OUT, K = 32, 3

    key = jax.random.PRNGKey(0)
    kx, kw, kg, kb, kbi = jax.random.split(key, 5)
    x = jax.random.normal(kx, (N, C_IN, H, W), dtype=jnp.float32)
    weight = jax.random.normal(kw, (C_OUT, C_IN, K, K), dtype=jnp.float32) * 0.1
    gamma = 1.0 + 0.1 * jax.random.normal(kg, (C_OUT,), dtype=jnp.float32)
    beta = 0.1 * jax.random.normal(kb, (C_OUT,), dtype=jnp.float32)
    bias = 0.1 * jax.random.normal(kbi, (C_OUT,), dtype=jnp.float32)

    # 1) bn=True, fully-fused single-step path (module default when bn requested)
    run_bn = jax.jit(functools.partial(conv_forward, bn=True))
    out_bn = jax.block_until_ready(run_bn(x, weight, bn_gamma=gamma, bn_beta=beta))
    ref_bn = conv_forward_ref(x, weight, gamma, beta, bn=True)
    assert out_bn.shape == (N, C_OUT, H, W)
    assert jnp.max(jnp.abs(out_bn - ref_bn)) < 2e-3, "bn=True fused mismatch"

    # 2) bn=True, two-pass grid path with VMEM h-cache (forced, exercises big-input path)
    run_bn_grid = jax.jit(functools.partial(conv_forward, bn=True, fuse_vmem_bytes=0))
    out_bn_g = jax.block_until_ready(
        run_bn_grid(x, weight, bn_gamma=gamma, bn_beta=beta))
    assert jnp.max(jnp.abs(out_bn_g - ref_bn)) < 2e-3, "bn=True grid mismatch"

    # 3) bn=False, plain conv + fused bias
    run_nb = jax.jit(functools.partial(conv_forward, bn=False))
    out_nb = jax.block_until_ready(run_nb(x, weight, bias=bias))
    ref_nb = conv_forward_ref(x, weight, bias=bias, bn=False)
    assert jnp.max(jnp.abs(out_nb - ref_nb)) < 2e-3, "bn=False mismatch"

    print("KERNEL_OK")
</pallas_src>

<mosaic_0001>
module attributes {stable_mosaic.version = 11 : i64} {
  func.func @_conv_bn_fused_kernel(%arg0: i32, %arg1: memref<2x36x256xbf16, #tpu.memory_space<vmem>>, %arg2: memref<32x36xbf16, #tpu.memory_space<vmem>>, %arg3: memref<32x1xf32, #tpu.memory_space<vmem>>, %arg4: memref<32x1xf32, #tpu.memory_space<vmem>>, %arg5: memref<2x32x256xf32, #tpu.memory_space<vmem>>) attributes {dimension_semantics = [#tpu.dimension_semantics<arbitrary>], iteration_bounds = array<i64: 1>, scalar_prefetch = 0 : i64, scratch_operands = 0 : i64, tpu.core_type = #tpu.core_type<tc>, window_params = [{pipeline_mode = #tpu.pipeline_mode<synchronous>, transform_indices = @transform_0, window_bounds = array<i64: 2, 36, 256>}, {pipeline_mode = #tpu.pipeline_mode<synchronous>, transform_indices = @transform_1, window_bounds = array<i64: 32, 36>}, {pipeline_mode = #tpu.pipeline_mode<synchronous>, transform_indices = @transform_2, window_bounds = array<i64: 32, 1>}, {pipeline_mode = #tpu.pipeline_mode<synchronous>, transform_indices = @transform_3, window_bounds = array<i64: 32, 1>}, {pipeline_mode = #tpu.pipeline_mode<synchronous>, transform_indices = @transform_4, window_bounds = array<i64: 2, 32, 256>}]} {
    %c0 = arith.constant 0 : index
    %c0_0 = arith.constant 0 : index
    %0 = vector.load %arg2[%c0, %c0_0] : memref<32x36xbf16, #tpu.memory_space<vmem>>, vector<32x36xbf16>
    %c0_1 = arith.constant 0 : index
    %c0_2 = arith.constant 0 : index
    %c0_3 = arith.constant 0 : index
    %1 = vector.load %arg1[%c0_1, %c0_2, %c0_3] : memref<2x36x256xbf16, #tpu.memory_space<vmem>>, vector<1x36x256xbf16>
    %2 = vector.shape_cast %1 : vector<1x36x256xbf16> to vector<36x256xbf16>
    %cst = arith.constant dense<0.000000e+00> : vector<32x256xf32>
    %3 = tpu.matmul %0, %2, %cst {dimension_numbers = #tpu.dot_dimension_numbers<[1], [0], [0], [1], [0, 0, 1, 1], [], []>} : vector<32x36xbf16>, vector<36x256xbf16>, vector<32x256xf32> -> vector<32x256xf32>
    %c0_4 = arith.constant 0 : index
    %c0_5 = arith.constant 0 : index
    %c0_6 = arith.constant 0 : index
    %4 = vector.load %arg5[%c0_4, %c0_5, %c0_6] : memref<2x32x256xf32, #tpu.memory_space<vmem>>, vector<1x32x256xf32>
    %5 = vector.shape_cast %4 : vector<1x32x256xf32> to vector<32x256xf32>
    %6 = vector.shape_cast %3 : vector<32x256xf32> to vector<1x32x256xf32>
    tpu.vector_store %arg5[%c0_4, %c0_5, %c0_6], %6 {strides = array<i32>} : memref<2x32x256xf32, #tpu.memory_space<vmem>>, vector<1x32x256xf32>,
    %cst_7 = arith.constant dense<0.000000e+00> : vector<32xf32>
    %7 = vector.multi_reduction <add>, %3, %cst_7 [1] : vector<32x256xf32> to vector<32xf32>
    %8 = vector.shape_cast %7 : vector<32xf32> to vector<32x1xf32>
    %9 = arith.mulf %3, %3 : vector<32x256xf32>
    %cst_8 = arith.constant dense<0.000000e+00> : vector<32xf32>
    %10 = vector.multi_reduction <add>, %9, %cst_8 [1] : vector<32x256xf32> to vector<32xf32>
    %11 = vector.shape_cast %10 : vector<32xf32> to vector<32x1xf32>
    %c1 = arith.constant 1 : index
    %c0_9 = arith.constant 0 : index
    %c0_10 = arith.constant 0 : index
    %12 = vector.load %arg1[%c1, %c0_9, %c0_10] : memref<2x36x256xbf16, #tpu.memory_space<vmem>>, vector<1x36x256xbf16>
    %13 = vector.shape_cast %12 : vector<1x36x256xbf16> to vector<36x256xbf16>
    %cst_11 = arith.constant dense<0.000000e+00> : vector<32x256xf32>
    %14 = tpu.matmul %0, %13, %cst_11 {dimension_numbers = #tpu.dot_dimension_numbers<[1], [0], [0], [1], [0, 0, 1, 1], [], []>} : vector<32x36xbf16>, vector<36x256xbf16>, vector<32x256xf32> -> vector<32x256xf32>
    %c1_12 = arith.constant 1 : index
    %c0_13 = arith.constant 0 : index
    %c0_14 = arith.constant 0 : index
    %15 = vector.load %arg5[%c1_12, %c0_13, %c0_14] : memref<2x32x256xf32, #tpu.memory_space<vmem>>, vector<1x32x256xf32>
    %16 = vector.shape_cast %15 : vector<1x32x256xf32> to vector<32x256xf32>
    %17 = vector.shape_cast %14 : vector<32x256xf32> to vector<1x32x256xf32>
    tpu.vector_store %arg5[%c1_12, %c0_13, %c0_14], %17 {strides = array<i32>} : memref<2x32x256xf32, #tpu.memory_space<vmem>>, vector<1x32x256xf32>,
    %cst_15 = arith.constant dense<0.000000e+00> : vector<32xf32>
    %18 = vector.multi_reduction <add>, %14, %cst_15 [1] : vector<32x256xf32> to vector<32xf32>
    %19 = vector.shape_cast %18 : vector<32xf32> to vector<32x1xf32>
    %20 = arith.mulf %14, %14 : vector<32x256xf32>
    %cst_16 = arith.constant dense<0.000000e+00> : vector<32xf32>
    %21 = vector.multi_reduction <add>, %20, %cst_16 [1] : vector<32x256xf32> to vector<32xf32>
    %22 = vector.shape_cast %21 : vector<32xf32> to vector<32x1xf32>
    %23 = arith.addf %8, %19 : vector<32x1xf32>
    %24 = arith.addf %11, %22 : vector<32x1xf32>
    %cst_17 = arith.constant 0.001953125 : f32
    %25 = vector.broadcast %cst_17 : f32 to vector<32x1xf32>
    %26 = arith.mulf %23, %25 : vector<32x1xf32>
    %cst_18 = arith.constant 0.001953125 : f32
    %27 = vector.broadcast %cst_18 : f32 to vector<32x1xf32>
    %28 = arith.mulf %24, %27 : vector<32x1xf32>
    %29 = arith.mulf %26, %26 : vector<32x1xf32>
    %30 = arith.subf %28, %29 : vector<32x1xf32>
    %cst_19 = arith.constant 0.000000e+00 : f32
    %31 = vector.broadcast %cst_19 : f32 to vector<32x1xf32>
    %32 = arith.maximumf %30, %31 : vector<32x1xf32>
    %c0_20 = arith.constant 0 : index
    %c0_21 = arith.constant 0 : index
    %33 = vector.load %arg3[%c0_20, %c0_21] : memref<32x1xf32, #tpu.memory_space<vmem>>, vector<32x1xf32>
    %cst_22 = arith.constant 9.99999974E-6 : f32
    %34 = vector.broadcast %cst_22 : f32 to vector<32x1xf32>
    %35 = arith.addf %32, %34 : vector<32x1xf32>
    %36 = math.rsqrt %35 : vector<32x1xf32>
    %37 = arith.mulf %33, %36 : vector<32x1xf32>
    %c0_23 = arith.constant 0 : index
    %c0_24 = arith.constant 0 : index
    %38 = vector.load %arg4[%c0_23, %c0_24] : memref<32x1xf32, #tpu.memory_space<vmem>>, vector<32x1xf32>
    %39 = arith.mulf %26, %37 : vector<32x1xf32>
    %40 = arith.subf %38, %39 : vector<32x1xf32>
    %c0_25 = arith.constant 0 : index
    %c0_26 = arith.constant 0 : index
    %c0_27 = arith.constant 0 : index
    %41 = vector.load %arg5[%c0_25, %c0_26, %c0_27] : memref<2x32x256xf32, #tpu.memory_space<vmem>>, vector<1x32x256xf32>
    %42 = vector.shape_cast %41 : vector<1x32x256xf32> to vector<32x256xf32>
    %43 = vector.broadcast %37 : vector<32x1xf32> to vector<32x256xf32>
    %44 = arith.mulf %42, %43 : vector<32x256xf32>
    %45 = vector.broadcast %40 : vector<32x1xf32> to vector<32x256xf32>
    %46 = arith.addf %44, %45 : vector<32x256xf32>
    %c0_28 = arith.constant 0 : index
    %c0_29 = arith.constant 0 : index
    %c0_30 = arith.constant 0 : index
    %47 = vector.load %arg5[%c0_28, %c0_29, %c0_30] : memref<2x32x256xf32, #tpu.memory_space<vmem>>, vector<1x32x256xf32>
    %48 = vector.shape_cast %47 : vector<1x32x256xf32> to vector<32x256xf32>
    %49 = vector.shape_cast %46 : vector<32x256xf32> to vector<1x32x256xf32>
    tpu.vector_store %arg5[%c0_28, %c0_29, %c0_30], %49 {strides = array<i32>} : memref<2x32x256xf32, #tpu.memory_space<vmem>>, vector<1x32x256xf32>,
    %c1_31 = arith.constant 1 : index
    %c0_32 = arith.constant 0 : index
    %c0_33 = arith.constant 0 : index
    %50 = vector.load %arg5[%c1_31, %c0_32, %c0_33] : memref<2x32x256xf32, #tpu.memory_space<vmem>>, vector<1x32x256xf32>
    %51 = vector.shape_cast %50 : vector<1x32x256xf32> to vector<32x256xf32>
    %52 = vector.broadcast %37 : vector<32x1xf32> to vector<32x256xf32>
    %53 = arith.mulf %51, %52 : vector<32x256xf32>
    %54 = vector.broadcast %40 : vector<32x1xf32> to vector<32x256xf32>
    %55 = arith.addf %53, %54 : vector<32x256xf32>
    %c1_34 = arith.constant 1 : index
    %c0_35 = arith.constant 0 : index
    %c0_36 = arith.constant 0 : index
    %56 = vector.load %arg5[%c1_34, %c0_35, %c0_36] : memref<2x32x256xf32, #tpu.memory_space<vmem>>, vector<1x32x256xf32>
    %57 = vector.shape_cast %56 : vector<1x32x256xf32> to vector<32x256xf32>
    %58 = vector.shape_cast %55 : vector<32x256xf32> to vector<1x32x256xf32>
    tpu.vector_store %arg5[%c1_34, %c0_35, %c0_36], %58 {strides = array<i32>} : memref<2x32x256xf32, #tpu.memory_space<vmem>>, vector<1x32x256xf32>,
    return
  }
  func.func @transform_0(%arg0: i32) -> (i32, i32, i32) {
    %c0_i32 = arith.constant 0 : i32
    %c0_i32_0 = arith.constant 0 : i32
    %c0_i32_1 = arith.constant 0 : i32
    %c0_i32_2 = arith.constant 0 : i32
    return %c0_i32, %c0_i32_0, %c0_i32_1 : i32, i32, i32
  }
  func.func @transform_1(%arg0: i32) -> (i32, i32) {
    %c0_i32 = arith.constant 0 : i32
    %c0_i32_0 = arith.constant 0 : i32
    %c0_i32_1 = arith.constant 0 : i32
    return %c0_i32, %c0_i32_0 : i32, i32
  }
  func.func @transform_2(%arg0: i32) -> (i32, i32) {
    %c0_i32 = arith.constant 0 : i32
    %c0_i32_0 = arith.constant 0 : i32
    %c0_i32_1 = arith.constant 0 : i32
    return %c0_i32, %c0_i32_0 : i32, i32
  }
  func.func @transform_3(%arg0: i32) -> (i32, i32) {
    %c0_i32 = arith.constant 0 : i32
    %c0_i32_0 = arith.constant 0 : i32
    %c0_i32_1 = arith.constant 0 : i32
    return %c0_i32, %c0_i32_0 : i32, i32
  }
  func.func @transform_4(%arg0: i32) -> (i32, i32, i32) {
    %c0_i32 = arith.constant 0 : i32
    %c0_i32_0 = arith.constant 0 : i32
    %c0_i32_1 = arith.constant 0 : i32
    %c0_i32_2 = arith.constant 0 : i32
    return %c0_i32, %c0_i32_0, %c0_i32_1 : i32, i32, i32
  }
}

</mosaic_0001>

<llo_original>
// kernel: conv_forward.1
$region0: #{conv_forward.1}
  #allocation0 [shape = 'u32[]', space=smem, size = 0x4, offset = 0x4, fixed_abs, tag = 'smem constant byte address 0x4 - core index']
  #allocation1 [shape = 'u32[144,128]{1,0:T(1,128)}', space=vmem, size = 0x12000, scoped, tag = 'internal scratch']
  %s0 = inlined_call_operand.vmem [shape: bf16[2,36,256], index: 0, kind: input, shape index: {}]
  %s1 = inlined_call_operand.vmem [shape: bf16[32,36], index: 1, kind: input, shape index: {}]
  %s2 = inlined_call_operand.vmem [shape: f32[32,1], index: 2, kind: input, shape index: {}]
  %s3 = inlined_call_operand.vmem [shape: f32[32,1], index: 3, kind: input, shape index: {}]
  %s4 = inlined_call_operand.vmem [shape: f32[2,32,256], index: 4, kind: output, shape index: {}]
  %s5 = sld [smem:[#allocation0]]
  $region26: #{conv_forward.1} parent=0
    _
  %s7 = ssub.s32 1, %s5
  %s8 = scalar_select 0, %s7, %s5
  // Predicated region
  $region2: #{conv_forward.1} parent=0 // pred_check
    _
  $region3: #{conv_forward.1} parent=0 // pred_check_branch
    %10 = sbr.rel (0) target = $region5
  $region4: #{conv_forward.1} parent=0 // pred_region
    _
  $region5: #{conv_forward.1} parent=0 // pred_fallthru
    _
  // Predicated region
  $region6: #{conv_forward.1} parent=0 // pred_check
    _
  $region7: #{conv_forward.1} parent=0 // pred_check_branch
    %12 = sbr.rel (0) target = $region9
  $region8: #{conv_forward.1} parent=0 // pred_region
    _
  $region9: #{conv_forward.1} parent=0 // pred_fallthru
    _
  // Predicated region
  $region10: #{conv_forward.1} parent=0 // pred_check
    _
  $region11: #{conv_forward.1} parent=0 // pred_check_branch
    %14 = sbr.rel (0) target = $region13
  $region12: #{conv_forward.1} parent=0 // pred_region
    _
  $region13: #{conv_forward.1} parent=0 // pred_fallthru
    _
  // Predicated region
  $region14: #{conv_forward.1} parent=0 // pred_check
    _
  $region15: #{conv_forward.1} parent=0 // pred_check_branch
    %16 = sbr.rel (0) target = $region17
  $region16: #{conv_forward.1} parent=0 // pred_region
    _
  $region17: #{conv_forward.1} parent=0 // pred_fallthru
    _
  %v18 = vld [vmem:[%s1] sm:$0xf]
  %v19 = vld [vmem:[%s1 + $0x4] sm:$0xf]
  %v20 = vld [vmem:[%s1 + $0x8] sm:$0xf]
  %v21 = vld [vmem:[%s1 + $0xc] sm:$0xf]
  %v22 = vld [vmem:[%s0] sm:$0xff]
  %v23 = vld [vmem:[%s0 + $0x8] sm:$0xff]
  %v24 = vld [vmem:[%s0 + $0x10] sm:$0xff]
  %v25 = vld [vmem:[%s0 + $0x18] sm:$0xff]
  %v26 = vld [vmem:[%s0 + $0x20] sm:$0x33]
  %v31 = vunpack.c.l.b16 %v18
  %v32 = vunpack.c.l.b16 %v19
  %v33 = vunpack.c.l.b16 %v20
  %v34 = vunpack.c.l.b16 %v21
  %v35 = vpack.c.b16 %v32, %v31
  %v36 = vpack.c.b16 %v34, %v33
  %v42 = vunpack.c.l.b16 %v22
  %v43 = vunpack.c.h.b16 %v22
  %v44 = vunpack.c.l.b16 %v23
  %v45 = vunpack.c.h.b16 %v23
  %v46 = vunpack.c.l.b16 %v24
  %v47 = vunpack.c.h.b16 %v24
  %v48 = vunpack.c.l.b16 %v25
  %v49 = vunpack.c.h.b16 %v25
  %v50 = vunpack.c.l.b16 %v26
  %v51 = vunpack.c.h.b16 %v26
  %v52 = vpack.c.b16 %v44, %v42
  %v53 = vpack.c.b16 %v45, %v43
  %v54 = vpack.c.b16 %v48, %v46
  %v55 = vpack.c.b16 %v49, %v47
  %v56 = vpack.c.b16 %v50, %v50
  %v57 = vpack.c.b16 %v51, %v51
  %vm62 = vcmask 293888
  %v64 = vsel %vm62, %v35, 0
  %v67 = vsel %vm62, %v36, 0
  %vm69 = vcmask 1041408
  %v71 = vsel %vm69, %v56, 0
  %v74 = vsel %vm69, %v57, 0
  %76 = vmatprep.subr.bf16.mxu0 %v53
  %77 = vmatpush1.bf16.msra.mxu0 %v52
  %78 = vmatprep.subr.bf16.mxu0 %v55
  %79 = vmatpush1.bf16.msra.mxu0 %v54
  %80 = vmatprep.subr.bf16.mxu0 %v74
  %81 = vmatpush1.bf16.msra.mxu0 %v71
  %82 = vmatprep.subr.bf16.mxu0 0
  %83 = vmatpush1.bf16.msra.mxu0 0
  %84 = vmatprep.subr.bf16.mxu0 0
  %85 = vmatpush1.bf16.msra.mxu0 0
  %86 = vmatprep.subr.bf16.mxu0 0
  %87 = vmatpush1.bf16.msra.mxu0 0
  %88 = vmatprep.subr.bf16.mxu0 0
  %89 = vmatpush1.bf16.msra.mxu0 0
  %90 = vmatprep.subr.bf16.mxu0 0
  %91 = vmatpush1.bf16.msra.mxu0 0
  %92 = vmatprep.subr.bf16.mxu0 0
  %93 = vmatpush1.bf16.msra.mxu0 0
  %94 = vmatprep.subr.bf16.mxu0 0
  %95 = vmatpush1.bf16.msra.mxu0 0
  %96 = vmatprep.subr.bf16.mxu0 0
  %97 = vmatpush1.bf16.msra.mxu0 0
  %98 = vmatprep.subr.bf16.mxu0 0
  %99 = vmatpush1.bf16.msra.mxu0 0
  %100 = vmatprep.subr.bf16.mxu0 0
  %101 = vmatpush1.bf16.msra.mxu0 0
  %102 = vmatprep.subr.bf16.mxu0 0
  %103 = vmatpush1.bf16.msra.mxu0 0
  %104 = vmatprep.subr.bf16.mxu0 0
  %105 = vmatpush1.bf16.msra.mxu0 0
  %106 = vmatprep.subr.bf16.mxu0 0
  %107 = vmatpush1.bf16.msra.mxu0 0
  %108 = vmatprep.mubr.bf16.mxu0 0
  %109 = vmatmul.mubr.bf16.gmra.mrb[0].mxu0 %v64
  %v110 = vpop.f32.mrb[0].mxu0
  %v111 = vadd.f32 0.0, %v110
  %v112 = vpop.f32.mrb[0].mxu0
  %v113 = vadd.f32 0.0, %v112
  %v114 = vpop.f32.mrb[0].mxu0
  %v115 = vadd.f32 0.0, %v114
  %v116 = vpop.f32.mrb[0].mxu0
  %v117 = vadd.f32 0.0, %v116
  %118 = vmatprep.mubr.bf16.mxu0 0
  %119 = vmatmul.mubr.bf16.gmra.mrb[0].mxu0 %v67
  %v120 = vpop.f32.mrb[0].mxu0
  %v121 = vadd.f32 0.0, %v120
  %v122 = vpop.f32.mrb[0].mxu0
  %v123 = vadd.f32 0.0, %v122
  %v124 = vpop.f32.mrb[0].mxu0
  %v125 = vadd.f32 0.0, %v124
  %v126 = vpop.f32.mrb[0].mxu0
  %v127 = vadd.f32 0.0, %v126
  %128 = vdwg.mxu0
  %129 = vst [vmem:[%s4] sm:$0xff] %v111
  %130 = vst [vmem:[%s4 + $0x8] sm:$0xff] %v113
  %131 = vst [vmem:[%s4 + $0x10] sm:$0xff] %v115
  %132 = vst [vmem:[%s4 + $0x18] sm:$0xff] %v117
  %133 = vst [vmem:[%s4 + $0x20] sm:$0xff] %v121
  %134 = vst [vmem:[%s4 + $0x28] sm:$0xff] %v123
  %135 = vst [vmem:[%s4 + $0x30] sm:$0xff] %v125
  %136 = vst [vmem:[%s4 + $0x38] sm:$0xff] %v127
  %v137 = vadd.f32 %v111, %v113
  %138 = vadd.xlane.f32.xlu0 %v137
  %v139 = vpop.xlane.xlu0 %138
  %v140 = vadd.f32 %v115, %v117
  %141 = vadd.xlane.f32.xlu0 %v140
  %v142 = vpop.xlane.xlu0 %141
  %v143 = vadd.f32 %v121, %v123
  %144 = vadd.xlane.f32.xlu0 %v143
  %v145 = vpop.xlane.xlu0 %144
  %v146 = vadd.f32 %v125, %v127
  %147 = vadd.xlane.f32.xlu0 %v146
  %v148 = vpop.xlane.xlu0 %147
  %v149 = vmul.f32 %v111, %v111
  %v150 = vmul.f32 %v113, %v113
  %v151 = vmul.f32 %v115, %v115
  %v152 = vmul.f32 %v117, %v117
  %v153 = vmul.f32 %v121, %v121
  %v154 = vmul.f32 %v123, %v123
  %v155 = vmul.f32 %v125, %v125
  %v156 = vmul.f32 %v127, %v127
  %v157 = vadd.f32 %v149, %v150
  %158 = vadd.xlane.f32.xlu0 %v157
  %v159 = vpop.xlane.xlu0 %158
  %v160 = vadd.f32 %v151, %v152
  %161 = vadd.xlane.f32.xlu0 %v160
  %v162 = vpop.xlane.xlu0 %161
  %v163 = vadd.f32 %v153, %v154
  %164 = vadd.xlane.f32.xlu0 %v163
  %v165 = vpop.xlane.xlu0 %164
  %v166 = vadd.f32 %v155, %v156
  %167 = vadd.xlane.f32.xlu0 %v166
  %v168 = vpop.xlane.xlu0 %167
  %s169 = scalar_lea.vmem %s0, 40
  %v170 = vld [vmem:[%s169] sm:$0xff]
  %v171 = vld [vmem:[%s169 + $0x8] sm:$0xff]
  %v172 = vld [vmem:[%s169 + $0x10] sm:$0xff]
  %v173 = vld [vmem:[%s169 + $0x18] sm:$0xff]
  %v174 = vld [vmem:[%s169 + $0x20] sm:$0x33]
  %v180 = vunpack.c.l.b16 %v170
  %v181 = vunpack.c.h.b16 %v170
  %v182 = vunpack.c.l.b16 %v171
  %v183 = vunpack.c.h.b16 %v171
  %v184 = vunpack.c.l.b16 %v172
  %v185 = vunpack.c.h.b16 %v172
  %v186 = vunpack.c.l.b16 %v173
  %v187 = vunpack.c.h.b16 %v173
  %v188 = vunpack.c.l.b16 %v174
  %v189 = vunpack.c.h.b16 %v174
  %v190 = vpack.c.b16 %v182, %v180
  %v191 = vpack.c.b16 %v183, %v181
  %v192 = vpack.c.b16 %v186, %v184
  %v193 = vpack.c.b16 %v187, %v185
  %v194 = vpack.c.b16 %v188, %v188
  %v195 = vpack.c.b16 %v189, %v189
  %v201 = vsel %vm69, %v194, 0
  %v204 = vsel %vm69, %v195, 0
  %206 = vmatprep.subr.bf16.mxu0 %v191
  %207 = vmatpush1.bf16.msra.mxu0 %v190
  %208 = vmatprep.subr.bf16.mxu0 %v193
  %209 = vmatpush1.bf16.msra.mxu0 %v192
  %210 = vmatprep.subr.bf16.mxu0 %v204
  %211 = vmatpush1.bf16.msra.mxu0 %v201
  %212 = vmatprep.subr.bf16.mxu0 0
  %213 = vmatpush1.bf16.msra.mxu0 0
  %214 = vmatprep.subr.bf16.mxu0 0
  %215 = vmatpush1.bf16.msra.mxu0 0
  %216 = vmatprep.subr.bf16.mxu0 0
  %217 = vmatpush1.bf16.msra.mxu0 0
  %218 = vmatprep.subr.bf16.mxu0 0
  %219 = vmatpush1.bf16.msra.mxu0 0
  %220 = vmatprep.subr.bf16.mxu0 0
  %221 = vmatpush1.bf16.msra.mxu0 0
  %222 = vmatprep.subr.bf16.mxu0 0
  %223 = vmatpush1.bf16.msra.mxu0 0
  %224 = vmatprep.subr.bf16.mxu0 0
  %225 = vmatpush1.bf16.msra.mxu0 0
  %226 = vmatprep.subr.bf16.mxu0 0
  %227 = vmatpush1.bf16.msra.mxu0 0
  %228 = vmatprep.subr.bf16.mxu0 0
  %229 = vmatpush1.bf16.msra.mxu0 0
  %230 = vmatprep.subr.bf16.mxu0 0
  %231 = vmatpush1.bf16.msra.mxu0 0
  %232 = vmatprep.subr.bf16.mxu0 0
  %233 = vmatpush1.bf16.msra.mxu0 0
  %234 = vmatprep.subr.bf16.mxu0 0
  %235 = vmatpush1.bf16.msra.mxu0 0
  %236 = vmatprep.subr.bf16.mxu0 0
  %237 = vmatpush1.bf16.msra.mxu0 0
  %238 = vmatprep.mubr.bf16.mxu0 0
  %239 = vmatmul.mubr.bf16.gmra.mrb[0].mxu0 %v64
  %v240 = vpop.f32.mrb[0].mxu0
  %v241 = vadd.f32 0.0, %v240
  %v242 = vpop.f32.mrb[0].mxu0
  %v243 = vadd.f32 0.0, %v242
  %v244 = vpop.f32.mrb[0].mxu0
  %v245 = vadd.f32 0.0, %v244
  %v246 = vpop.f32.mrb[0].mxu0
  %v247 = vadd.f32 0.0, %v246
  %248 = vmatprep.mubr.bf16.mxu0 0
  %249 = vmatmul.mubr.bf16.gmra.mrb[0].mxu0 %v67
  %v250 = vpop.f32.mrb[0].mxu0
  %v251 = vadd.f32 0.0, %v250
  %v252 = vpop.f32.mrb[0].mxu0
  %v253 = vadd.f32 0.0, %v252
  %v254 = vpop.f32.mrb[0].mxu0
  %v255 = vadd.f32 0.0, %v254
  %v256 = vpop.f32.mrb[0].mxu0
  %v257 = vadd.f32 0.0, %v256
  %258 = vdwg.mxu0
  %s259 = scalar_lea.vmem %s4, 64
  %260 = vst [vmem:[%s259] sm:$0xff] %v241
  %261 = vst [vmem:[%s259 + $0x8] sm:$0xff] %v243
  %262 = vst [vmem:[%s259 + $0x10] sm:$0xff] %v245
  %263 = vst [vmem:[%s259 + $0x18] sm:$0xff] %v247
  %264 = vst [vmem:[%s259 + $0x20] sm:$0xff] %v251
  %265 = vst [vmem:[%s259 + $0x28] sm:$0xff] %v253
  %266 = vst [vmem:[%s259 + $0x30] sm:$0xff] %v255
  %267 = vst [vmem:[%s259 + $0x38] sm:$0xff] %v257
  %v268 = vadd.f32 %v241, %v243
  %269 = vadd.xlane.f32.xlu0 %v268
  %v270 = vpop.xlane.xlu0 %269
  %v271 = vadd.f32 %v245, %v247
  %272 = vadd.xlane.f32.xlu0 %v271
  %v273 = vpop.xlane.xlu0 %272
  %v274 = vadd.f32 %v251, %v253
  %275 = vadd.xlane.f32.xlu0 %v274
  %v276 = vpop.xlane.xlu0 %275
  %v277 = vadd.f32 %v255, %v257
  %278 = vadd.xlane.f32.xlu0 %v277
  %v279 = vpop.xlane.xlu0 %278
  %v280 = vmul.f32 %v241, %v241
  %v281 = vmul.f32 %v243, %v243
  %v282 = vmul.f32 %v245, %v245
  %v283 = vmul.f32 %v247, %v247
  %v284 = vmul.f32 %v251, %v251
  %v285 = vmul.f32 %v253, %v253
  %v286 = vmul.f32 %v255, %v255
  %v287 = vmul.f32 %v257, %v257
  %v288 = vadd.f32 %v280, %v281
  %289 = vadd.xlane.f32.xlu0 %v288
  %v290 = vpop.xlane.xlu0 %289
  %v291 = vadd.f32 %v282, %v283
  %292 = vadd.xlane.f32.xlu0 %v291
  %v293 = vpop.xlane.xlu0 %292
  %v294 = vadd.f32 %v284, %v285
  %295 = vadd.xlane.f32.xlu0 %v294
  %v296 = vpop.xlane.xlu0 %295
  %v297 = vadd.f32 %v286, %v287
  %298 = vadd.xlane.f32.xlu0 %v297
  %v299 = vpop.xlane.xlu0 %298
  %v300 = vadd.f32 %v139, %v270
  %v301 = vadd.f32 %v142, %v273
  %v302 = vadd.f32 %v145, %v276
  %v303 = vadd.f32 %v148, %v279
  %v304 = vadd.f32 %v159, %v290
  %v305 = vadd.f32 %v162, %v293
  %v306 = vadd.f32 %v165, %v296
  %v307 = vadd.f32 %v168, %v299
  %v308 = vmul.f32 %v300, 0.001953125
  %v309 = vmul.f32 %v301, 0.001953125
  %v310 = vmul.f32 %v302, 0.001953125
  %v311 = vmul.f32 %v303, 0.001953125
  %v312 = vmul.f32 %v304, 0.001953125
  %v313 = vmul.f32 %v305, 0.001953125
  %v314 = vmul.f32 %v306, 0.001953125
  %v315 = vmul.f32 %v307, 0.001953125
  %v316 = vmul.f32 %v308, %v308
  %v317 = vmul.f32 %v309, %v309
  %v318 = vmul.f32 %v310, %v310
  %v319 = vmul.f32 %v311, %v311
  %v320 = vsub.f32 %v312, %v316
  %v321 = vsub.f32 %v313, %v317
  %v322 = vsub.f32 %v314, %v318
  %v323 = vsub.f32 %v315, %v319
  %v324 = vmax.f32 %v320, 0.0
  %v325 = vmax.f32 %v321, 0.0
  %v326 = vmax.f32 %v322, 0.0
  %v327 = vmax.f32 %v323, 0.0
  %v328 = vld [vmem:[%s2] sm:$0xff]
  %v329 = vld [vmem:[%s2 + $0x8] sm:$0xff]
  %v330 = vld [vmem:[%s2 + $0x10] sm:$0xff]
  %v331 = vld [vmem:[%s2 + $0x18] sm:$0xff]
  %v332 = vadd.f32 %v324, 1e-05
  %v333 = vadd.f32 %v325, 1e-05
  %v334 = vadd.f32 %v326, 1e-05
  %v335 = vadd.f32 %v327, 1e-05
  %v336 = vrsqrt.pop %v332
  %v337 = vrsqrt.pop %v333
  %v338 = vrsqrt.pop %v334
  %v339 = vrsqrt.pop %v335
  %v340 = vmul.f32 %v328, %v336
  %v341 = vmul.f32 %v329, %v337
  %v342 = vmul.f32 %v330, %v338
  %v343 = vmul.f32 %v331, %v339
  %v344 = vld [vmem:[%s3] sm:$0xff]
  %v345 = vld [vmem:[%s3 + $0x8] sm:$0xff]
  %v346 = vld [vmem:[%s3 + $0x10] sm:$0xff]
  %v347 = vld [vmem:[%s3 + $0x18] sm:$0xff]
  %v348 = vmul.f32 %v308, %v340
  %v349 = vmul.f32 %v309, %v341
  %v350 = vmul.f32 %v310, %v342
  %v351 = vmul.f32 %v311, %v343
  %v352 = vsub.f32 %v344, %v348
  %v353 = vsub.f32 %v345, %v349
  %v354 = vsub.f32 %v346, %v350
  %v355 = vsub.f32 %v347, %v351
  %v356 = vld [vmem:[%s4] sm:$0xff]
  %v357 = vld [vmem:[%s4 + $0x8] sm:$0xff]
  %v358 = vld [vmem:[%s4 + $0x10] sm:$0xff]
  %v359 = vld [vmem:[%s4 + $0x18] sm:$0xff]
  %v360 = vld [vmem:[%s4 + $0x20] sm:$0xff]
  %v361 = vld [vmem:[%s4 + $0x28] sm:$0xff]
  %v362 = vld [vmem:[%s4 + $0x30] sm:$0xff]
  %v363 = vld [vmem:[%s4 + $0x38] sm:$0xff]
  %365 = vset.pattern.permute.xlu0 0
  %366 = vperm.xlu0 %365, %v340
  %v367 = vpop.permute.xlu0 %366
  %370 = vset.pattern.permute.xlu0 0
  %371 = vperm.xlu0 %370, %v341
  %v372 = vpop.permute.xlu0 %371
  %375 = vset.pattern.permute.xlu0 0
  %376 = vperm.xlu0 %375, %v342
  %v377 = vpop.permute.xlu0 %376
  %380 = vset.pattern.permute.xlu0 0
  %381 = vperm.xlu0 %380, %v343
  %v382 = vpop.permute.xlu0 %381
  %v384 = vmul.f32 %v356, %v367
  %v385 = vmul.f32 %v357, %v367
  %v386 = vmul.f32 %v358, %v372
  %v387 = vmul.f32 %v359, %v372
  %v388 = vmul.f32 %v360, %v377
  %v389 = vmul.f32 %v361, %v377
  %v390 = vmul.f32 %v362, %v382
  %v391 = vmul.f32 %v363, %v382
  %393 = vset.pattern.permute.xlu0 0
  %394 = vperm.xlu0 %393, %v352
  %v395 = vpop.permute.xlu0 %394
  %398 = vset.pattern.permute.xlu0 0
  %399 = vperm.xlu0 %398, %v353
  %v400 = vpop.permute.xlu0 %399
  %403 = vset.pattern.permute.xlu0 0
  %404 = vperm.xlu0 %403, %v354
  %v405 = vpop.permute.xlu0 %404
  %408 = vset.pattern.permute.xlu0 0
  %409 = vperm.xlu0 %408, %v355
  %v410 = vpop.permute.xlu0 %409
  %v412 = vadd.f32 %v384, %v395
  %v413 = vadd.f32 %v385, %v395
  %v414 = vadd.f32 %v386, %v400
  %v415 = vadd.f32 %v387, %v400
  %v416 = vadd.f32 %v388, %v405
  %v417 = vadd.f32 %v389, %v405
  %v418 = vadd.f32 %v390, %v410
  %v419 = vadd.f32 %v391, %v410
  %420 = vst [vmem:[%s4] sm:$0xff] %v412
  %421 = vst [vmem:[%s4 + $0x8] sm:$0xff] %v413
  %422 = vst [vmem:[%s4 + $0x10] sm:$0xff] %v414
  %423 = vst [vmem:[%s4 + $0x18] sm:$0xff] %v415
  %424 = vst [vmem:[%s4 + $0x20] sm:$0xff] %v416
  %425 = vst [vmem:[%s4 + $0x28] sm:$0xff] %v417
  %426 = vst [vmem:[%s4 + $0x30] sm:$0xff] %v418
  %427 = vst [vmem:[%s4 + $0x38] sm:$0xff] %v419
  %v428 = vld [vmem:[%s259] sm:$0xff]
  %v429 = vld [vmem:[%s259 + $0x8] sm:$0xff]
  %v430 = vld [vmem:[%s259 + $0x10] sm:$0xff]
  %v431 = vld [vmem:[%s259 + $0x18] sm:$0xff]
  %v432 = vld [vmem:[%s259 + $0x20] sm:$0xff]
  %v433 = vld [vmem:[%s259 + $0x28] sm:$0xff]
  %v434 = vld [vmem:[%s259 + $0x30] sm:$0xff]
  %v435 = vld [vmem:[%s259 + $0x38] sm:$0xff]
  %v436 = vmul.f32 %v428, %v367
  %v437 = vmul.f32 %v429, %v367
  %v438 = vmul.f32 %v430, %v372
  %v439 = vmul.f32 %v431, %v372
  %v440 = vmul.f32 %v432, %v377
  %v441 = vmul.f32 %v433, %v377
  %v442 = vmul.f32 %v434, %v382
  %v443 = vmul.f32 %v435, %v382
  %v444 = vadd.f32 %v436, %v395
  %v445 = vadd.f32 %v437, %v395
  %v446 = vadd.f32 %v438, %v400
  %v447 = vadd.f32 %v439, %v400
  %v448 = vadd.f32 %v440, %v405
  %v449 = vadd.f32 %v441, %v405
  %v450 = vadd.f32 %v442, %v410
  %v451 = vadd.f32 %v443, %v410
  %452 = vst [vmem:[%s259] sm:$0xff] %v444
  %453 = vst [vmem:[%s259 + $0x8] sm:$0xff] %v445
  %454 = vst [vmem:[%s259 + $0x10] sm:$0xff] %v446
  %455 = vst [vmem:[%s259 + $0x18] sm:$0xff] %v447
  %456 = vst [vmem:[%s259 + $0x20] sm:$0xff] %v448
  %457 = vst [vmem:[%s259 + $0x28] sm:$0xff] %v449
  %458 = vst [vmem:[%s259 + $0x30] sm:$0xff] %v450
  %459 = vst [vmem:[%s259 + $0x38] sm:$0xff] %v451
  // Predicated region
  $region18: #{conv_forward.1} parent=0 // pred_check
    _
  $region19: #{conv_forward.1} parent=0 // pred_check_branch
    %461 = sbr.rel (0) target = $region21
  $region20: #{conv_forward.1} parent=0 // pred_region
    _
  $region21: #{conv_forward.1} parent=0 // pred_fallthru
    _
  // Predicated region
  $region22: #{conv_forward.1} parent=0 // pred_check
    _
  $region23: #{conv_forward.1} parent=0 // pred_check_branch
    %463 = sbr.rel (0) target = $region25
  $region24: #{conv_forward.1} parent=0 // pred_region
    _
  $region25: #{conv_forward.1} parent=0 // pred_fallthru
    _

</llo_original>
